<compile_context>
chip_gen: v7x
topology: tpu7x:2x2x1
jax: 0.10.0
libtpu: 0.0.40
codegen_flags: <defaults>
</compile_context>

<pallas_src>
import jax
import jax.numpy as jnp
from jax.experimental import pallas as pl
from jax.experimental.pallas import tpu as pltpu


def _kl_rows_kernel(f1_ref, f2_ref, r_ref):
    """Per-row KL(q || p) for one (TN, C) tile of logits.

    f1_ref : (TN, C) raw logits for the "input"  distribution (log_softmax here)
    f2_ref : (TN, C) raw logits for the "target" distribution (softmax here)
    r_ref  : (TN, 1) per-row KL sums (rows of a padded partial last tile are
             simply discarded by Pallas on writeback).
    """
    f1 = f1_ref[...].astype(jnp.float32)
    f2 = f2_ref[...].astype(jnp.float32)

    # log_softmax(f1) along classes (axis=1), max-subtracted for stability.
    m1 = jnp.max(f1, axis=1, keepdims=True)
    z1 = f1 - m1
    lse1 = jnp.log(jnp.sum(jnp.exp(z1), axis=1, keepdims=True))
    logp = z1 - lse1

    # softmax(f2): one exp pass, reused for the numerator and its row sum.
    m2 = jnp.max(f2, axis=1, keepdims=True)
    z2 = f2 - m2
    e2 = jnp.exp(z2)
    s2 = jnp.sum(e2, axis=1, keepdims=True)
    logq = z2 - jnp.log(s2)

    # sum_c q*(logq-logp) = (1/s2) * sum_c e2*(logq-logp):
    # factor the per-row normalizer out of the elementwise work (saves one
    # VPU multiply per element; one exact per-row reciprocal on the EUP).
    inner = jnp.sum(e2 * (logq - logp), axis=1, keepdims=True)     # (TN, 1)
    r_ref[...] = inner * pl.reciprocal(s2, approx=False)           # (TN, 1)


def _choose_tile_rows(n, c, itemsize):
    """Largest multiple-of-8 row tile that fits a conservative VMEM budget."""
    budget = 10 * 1024 * 1024                 # headroom under 16/32 MiB scoped VMEM
    # 2 inputs x 2 pipeline buffers (input dtype) + ~6 live f32 temporaries.
    per_row = 2 * 2 * c * itemsize + 6 * c * 4
    tn = max(8, (budget // per_row) // 8 * 8)
    tn = min(tn, 512)                         # 512-row tiles already near HBM roofline
    if n <= tn:
        return int(n)                         # single full block (always layout-legal)
    return int(tn)


def distribution_loss(f1, f2, label, *, num_labels=None, tile_rows=None):
    """JAX wrapper equivalent to Distribution_loss.forward(f1, f2, label)."""
    N, C = f1.shape
    label = label.reshape(N)

    tn = tile_rows if tile_rows is not None else _choose_tile_rows(
        N, C, jnp.dtype(f1.dtype).itemsize)
    num_tiles = pl.cdiv(N, tn)

    r = pl.pallas_call(
        _kl_rows_kernel,
        out_shape=jax.ShapeDtypeStruct((N, 1), jnp.float32),
        grid=(num_tiles,),
        in_specs=[
            pl.BlockSpec((tn, C), lambda i: (i, 0)),
            pl.BlockSpec((tn, C), lambda i: (i, 0)),
        ],
        out_specs=pl.BlockSpec((tn, 1), lambda i: (i, 0)),
        compiler_params=pltpu.CompilerParams(
            dimension_semantics=("parallel",),
            vmem_limit_bytes=32 * 1024 * 1024,
        ),
    )(f1, f2)

    # Per-label grouping collapses to per-row weights 1/(C * count[label_i]).
    # O(N) bincount when the label range is known, O(N log N) sort otherwise —
    # never the O(N^2) pairwise-comparison matrix.
    if num_labels is not None:
        per_label = jnp.zeros((num_labels,), jnp.float32).at[label].add(1.0)
        counts = per_label[label]
    else:
        s = jnp.sort(label)
        counts = (jnp.searchsorted(s, label, side="right")
                  - jnp.searchsorted(s, label, side="left")).astype(jnp.float32)

    w = 1.0 / (counts * jnp.float32(C))
    return jnp.sum(r[:, 0] * w)


def _reference_loss(f1, f2, label):
    """Pure-JAX reference mirroring the PyTorch module exactly."""
    N, C = f1.shape
    logp = jax.nn.log_softmax(f1.astype(jnp.float32), axis=1)
    q = jax.nn.softmax(f2.astype(jnp.float32), axis=1)
    r = jnp.sum(q * (jnp.log(q) - logp), axis=1)              # per-row KL sum
    counts = jnp.sum((label[:, None] == label[None, :]).astype(jnp.float32),
                     axis=1)
    return jnp.sum(r / (counts * C))


if __name__ == "__main__":
    key = jax.random.PRNGKey(0)
    k1, k2, k3, k4, k5, k6, k7, k8, k9 = jax.random.split(key, 9)

    # --- check 1: small batch, small class count (single tile, bincount path)
    N, C = 8, 32
    f1 = jax.random.normal(k1, (N, C), dtype=jnp.float32)
    f2 = jax.random.normal(k2, (N, C), dtype=jnp.float32)
    label = jax.random.randint(k3, (N,), 0, 3, dtype=jnp.int32)

    loss = jax.block_until_ready(distribution_loss(f1, f2, label, num_labels=3))
    ref = jax.block_until_ready(_reference_loss(f1, f2, label))
    assert jnp.allclose(loss, ref, rtol=1e-5, atol=1e-5), (loss, ref)

    # --- check 2: multi-tile grid with a partial last block (tile_rows=8, N=20)
    N2, C2 = 20, 256
    g1 = jax.random.normal(k4, (N2, C2), dtype=jnp.float32)
    g2 = jax.random.normal(k5, (N2, C2), dtype=jnp.float32)
    lab2 = jax.random.randint(k6, (N2,), 0, 5, dtype=jnp.int32)

    loss2 = jax.block_until_ready(distribution_loss(g1, g2, lab2, tile_rows=8))
    ref2 = jax.block_until_ready(_reference_loss(g1, g2, lab2))
    assert jnp.allclose(loss2, ref2, rtol=1e-5, atol=1e-5), (loss2, ref2)

    # --- check 3: bf16 logits (in-kernel upcast path, halves HBM traffic)
    N3, C3 = 16, 128
    h1 = jax.random.normal(k7, (N3, C3), dtype=jnp.bfloat16)
    h2 = jax.random.normal(k8, (N3, C3), dtype=jnp.bfloat16)
    lab3 = jax.random.randint(k9, (N3,), 0, 4, dtype=jnp.int32)

    loss3 = jax.block_until_ready(distribution_loss(h1, h2, lab3, num_labels=4))
    ref3 = jax.block_until_ready(_reference_loss(h1, h2, lab3))
    assert jnp.allclose(loss3, ref3, rtol=1e-3, atol=1e-3), (loss3, ref3)

    print("KERNEL_OK")
</pallas_src>

<mosaic_0001>
module attributes {stable_mosaic.version = 11 : i64} {
  func.func @_kl_rows_kernel(%arg0: i32, %arg1: memref<8x32xf32, #tpu.memory_space<vmem>>, %arg2: memref<8x32xf32, #tpu.memory_space<vmem>>, %arg3: memref<8x1xf32, #tpu.memory_space<vmem>>) attributes {dimension_semantics = [#tpu.dimension_semantics<parallel>], iteration_bounds = array<i64: 1>, scalar_prefetch = 0 : i64, scratch_operands = 0 : i64, tpu.core_type = #tpu.core_type<tc>, window_params = [{transform_indices = @transform_0, window_bounds = array<i64: 8, 32>}, {transform_indices = @transform_1, window_bounds = array<i64: 8, 32>}, {transform_indices = @transform_2, window_bounds = array<i64: 8, 1>}]} {
    %c0 = arith.constant 0 : index
    %c0_0 = arith.constant 0 : index
    %0 = vector.load %arg1[%c0, %c0_0] : memref<8x32xf32, #tpu.memory_space<vmem>>, vector<8x32xf32>
    %c0_1 = arith.constant 0 : index
    %c0_2 = arith.constant 0 : index
    %1 = vector.load %arg2[%c0_1, %c0_2] : memref<8x32xf32, #tpu.memory_space<vmem>>, vector<8x32xf32>
    %cst = arith.constant dense<0xFF800000> : vector<8xf32>
    %2 = vector.multi_reduction <maximumf>, %0, %cst [1] : vector<8x32xf32> to vector<8xf32>
    %3 = vector.shape_cast %2 : vector<8xf32> to vector<8x1xf32>
    %4 = vector.broadcast %3 : vector<8x1xf32> to vector<8x32xf32>
    %5 = arith.subf %0, %4 : vector<8x32xf32>
    %6 = math.exp %5 : vector<8x32xf32>
    %cst_3 = arith.constant dense<0.000000e+00> : vector<8xf32>
    %7 = vector.multi_reduction <add>, %6, %cst_3 [1] : vector<8x32xf32> to vector<8xf32>
    %8 = vector.shape_cast %7 : vector<8xf32> to vector<8x1xf32>
    %9 = math.log %8 : vector<8x1xf32>
    %10 = vector.broadcast %9 : vector<8x1xf32> to vector<8x32xf32>
    %11 = arith.subf %5, %10 : vector<8x32xf32>
    %cst_4 = arith.constant dense<0xFF800000> : vector<8xf32>
    %12 = vector.multi_reduction <maximumf>, %1, %cst_4 [1] : vector<8x32xf32> to vector<8xf32>
    %13 = vector.shape_cast %12 : vector<8xf32> to vector<8x1xf32>
    %14 = vector.broadcast %13 : vector<8x1xf32> to vector<8x32xf32>
    %15 = arith.subf %1, %14 : vector<8x32xf32>
    %16 = math.exp %15 : vector<8x32xf32>
    %cst_5 = arith.constant dense<0.000000e+00> : vector<8xf32>
    %17 = vector.multi_reduction <add>, %16, %cst_5 [1] : vector<8x32xf32> to vector<8xf32>
    %18 = vector.shape_cast %17 : vector<8xf32> to vector<8x1xf32>
    %19 = math.log %18 : vector<8x1xf32>
    %20 = vector.broadcast %19 : vector<8x1xf32> to vector<8x32xf32>
    %21 = arith.subf %15, %20 : vector<8x32xf32>
    %22 = arith.subf %21, %11 : vector<8x32xf32>
    %23 = arith.mulf %16, %22 : vector<8x32xf32>
    %cst_6 = arith.constant dense<0.000000e+00> : vector<8xf32>
    %24 = vector.multi_reduction <add>, %23, %cst_6 [1] : vector<8x32xf32> to vector<8xf32>
    %25 = vector.shape_cast %24 : vector<8xf32> to vector<8x1xf32>
    %26 = tpu.reciprocal %18 : vector<8x1xf32> -> vector<8x1xf32>
    %27 = arith.mulf %25, %26 : vector<8x1xf32>
    %c0_7 = arith.constant 0 : index
    %c0_8 = arith.constant 0 : index
    %28 = vector.load %arg3[%c0_7, %c0_8] : memref<8x1xf32, #tpu.memory_space<vmem>>, vector<8x1xf32>
    tpu.vector_store %arg3[%c0_7, %c0_8], %27 {strides = array<i32>} : memref<8x1xf32, #tpu.memory_space<vmem>>, vector<8x1xf32>,
    return
  }
  func.func @transform_0(%arg0: i32) -> (i32, i32) {
    %c0_i32 = arith.constant 0 : i32
    %c0_i32_0 = arith.constant 0 : i32
    return %arg0, %c0_i32 : i32, i32
  }
  func.func @transform_1(%arg0: i32) -> (i32, i32) {
    %c0_i32 = arith.constant 0 : i32
    %c0_i32_0 = arith.constant 0 : i32
    return %arg0, %c0_i32 : i32, i32
  }
  func.func @transform_2(%arg0: i32) -> (i32, i32) {
    %c0_i32 = arith.constant 0 : i32
    %c0_i32_0 = arith.constant 0 : i32
    return %arg0, %c0_i32 : i32, i32
  }
}

</mosaic_0001>

<llo_original>
// kernel: tpu_custom_call.1
$region0: #{tpu_custom_call.1}
  #allocation0 [shape = 'u32[]', space=smem, size = 0x4, offset = 0x4, fixed_abs, tag = 'smem constant byte address 0x4 - core index']
  #allocation1 [shape = 'u32[144,128]{1,0:T(1,128)}', space=vmem, size = 0x12000, scoped, tag = 'internal scratch']
  %s0 = inlined_call_operand.hbm [shape: f32[8,32], index: 0, kind: input, shape index: {}]
  %s1 = inlined_call_operand.hbm [shape: f32[8,32], index: 1, kind: input, shape index: {}]
  %s2 = inlined_call_operand.vmem [shape: f32[8,1], index: 2, kind: output, shape index: {}]
  %s3 = sld [smem:[#allocation0]]
  $region26: #{tpu_custom_call.1} parent=0
    _
  %s5 = ssub.s32 1, %s3
  %s6 = scalar_select 0, %s5, %s3
  $region1: #{tpu_custom_call.1} parent=0
    #allocation2 [shape = 'u8[4096]{0}', space=vmem, size = 0x1000, scoped, tag = 'input window, operand 0, single buffered']
    #allocation3 [shape = 's32[1]{0}', space=sflag, size = 0x4, scoped, tag = 'scoped memory for tpu_custom_call.1']
    #allocation4 [shape = 'u8[4096]{0}', space=vmem, size = 0x1000, scoped, tag = 'input window, operand 1, single buffered']
    #allocation5 [shape = 's32[1]{0}', space=sflag, size = 0x4, scoped, tag = 'scoped memory for tpu_custom_call.1']
    %7 = vsyncpa [#allocation3], 0
    %8 = vsyncpa [#allocation5], 0
    // Predicated region
    $region2: #{tpu_custom_call.1} parent=1 // pred_check
      _
    $region3: #{tpu_custom_call.1} parent=1 // pred_check_branch
      %10 = sbr.rel (0) target = $region5
    $region4: #{tpu_custom_call.1} parent=1 // pred_region
      %s12 = ssub.s32 128, 128
      %13 = vsyncadd [#allocation3], %s12
      %s15 = sshll.u32 [#allocation2], 4
      %s16 = int_to_ptr.vmem [resolvable:$true] %s15
      %18 = dma.hbm_to_vmem [thread:$0]  %s0, 128, %s16, [#allocation3]
    $region5: #{tpu_custom_call.1} parent=1 // pred_fallthru
      _
    // Predicated region
    $region6: #{tpu_custom_call.1} parent=1 // pred_check
      _
    $region7: #{tpu_custom_call.1} parent=1 // pred_check_branch
      %20 = sbr.rel (0) target = $region9
    $region8: #{tpu_custom_call.1} parent=1 // pred_region
      %s22 = ssub.s32 128, 128
      %23 = vsyncadd [#allocation5], %s22
      %s25 = sshll.u32 [#allocation4], 4
      %s26 = int_to_ptr.vmem [resolvable:$true] %s25
      %28 = dma.hbm_to_vmem [thread:$0]  %s1, 128, %s26, [#allocation5]
    $region9: #{tpu_custom_call.1} parent=1 // pred_fallthru
      _
    // Predicated region
    $region10: #{tpu_custom_call.1} parent=1 // pred_check
      _
    $region11: #{tpu_custom_call.1} parent=1 // pred_check_branch
      %30 = sbr.rel (0) target = $region13
    $region12: #{tpu_custom_call.1} parent=1 // pred_region
      %31 = dma.done [#allocation3], 128
    $region13: #{tpu_custom_call.1} parent=1 // pred_fallthru
      _
    // Predicated region
    $region14: #{tpu_custom_call.1} parent=1 // pred_check
      _
    $region15: #{tpu_custom_call.1} parent=1 // pred_check_branch
      %33 = sbr.rel (0) target = $region17
    $region16: #{tpu_custom_call.1} parent=1 // pred_region
      %34 = dma.done [#allocation5], 128
    $region17: #{tpu_custom_call.1} parent=1 // pred_fallthru
      _
    %v35 = vld [vmem:[#allocation2] sm:$0xff]
    %v36 = vld [vmem:[#allocation4] sm:$0xff]
    %vm37 = vcmask 261120
    %v38 = vsel %vm37, %v35, -inf
    %39 = vmax.xlane.f32.xlu0 %v38
    %v40 = vpop.xlane.xlu0 %39
    %v41 = vsub.f32 %v35, %v40
    %v42 = vmul.f32 %v41, 1.442695
    %v43 = vpow.pop %v42
    %v44 = vsel %vm37, %v43, 0.0
    %45 = vadd.xlane.f32.xlu0 %v44
    %v46 = vpop.xlane.xlu0 %45
    %v47 = vlog2.pop %v46
    %v48 = vmul.f32 %v47, 0.6931472
    %v49 = vsub.f32 %v41, %v48
    %v50 = vsel %vm37, %v36, -inf
    %51 = vmax.xlane.f32.xlu0 %v50
    %v52 = vpop.xlane.xlu0 %51
    %v53 = vsub.f32 %v36, %v52
    %v54 = vmul.f32 %v53, 1.442695
    %v55 = vpow.pop %v54
    %v56 = vsel %vm37, %v55, 0.0
    %57 = vadd.xlane.f32.xlu0 %v56
    %v58 = vpop.xlane.xlu0 %57
    %v59 = vlog2.pop %v58
    %v60 = vmul.f32 %v59, 0.6931472
    %v61 = vsub.f32 %v53, %v60
    %v62 = vsub.f32 %v61, %v49
    %v63 = vmul.f32 %v55, %v62
    %v64 = vsel %vm37, %v63, 0.0
    %65 = vadd.xlane.f32.xlu0 %v64
    %v66 = vpop.xlane.xlu0 %65
    %v67 = vrcp.pop %v58
    %v68 = vmul.f32 %v66, %v67
    %vm69 = vcmask 7168
    %70 = vst.msk [vmem:[%s2] sm:$0xff] %vm69, %v68
    // Predicated region
    $region18: #{tpu_custom_call.1} parent=1 // pred_check
      _
    $region19: #{tpu_custom_call.1} parent=1 // pred_check_branch
      %72 = sbr.rel (0) target = $region21
    $region20: #{tpu_custom_call.1} parent=1 // pred_region
      _
    $region21: #{tpu_custom_call.1} parent=1 // pred_fallthru
      _
    // Predicated region
    $region22: #{tpu_custom_call.1} parent=1 // pred_check
      _
    $region23: #{tpu_custom_call.1} parent=1 // pred_check_branch
      %74 = sbr.rel (0) target = $region25
    $region24: #{tpu_custom_call.1} parent=1 // pred_region
      _
    $region25: #{tpu_custom_call.1} parent=1 // pred_fallthru
      _
    %75 = vsyncpa [#allocation3], 1
    %76 = vsyncpa [#allocation5], 1

</llo_original>
